<compile_context>
chip_gen: v7x
topology: tpu7x:2x2x1
jax: 0.10.0
libtpu: 0.0.40
codegen_flags: <defaults>
</compile_context>

<pallas_src>
import functools

import jax
import jax.numpy as jnp
from jax.experimental import pallas as pl
from jax.experimental.pallas import tpu as pltpu

VECTOR_LEN = 2
D = VECTOR_LEN * 2            # 4 = in/out features of L1, L2
NTERMS = (D + 1) * D          # 20 augmented quadratic-form terms per output
LANE = 128                    # TPU lane width


# ----------------------------------------------------------------------------
# Kernel: nodes on lanes, pure VPU + EUP, sublane reduces, lane-dense output.
# ----------------------------------------------------------------------------
def rntn_batched_kernel(coeff_ref, xt_ref, out_ref):
    # coeff_ref: (20, 2) f32. Row m = 4*i + j holds [A1[i, j], A2[i, j]] with
    #            A_k = [[W_k rows 0..3], [b_k]]  (the augmented (5, 4) block).
    # xt_ref:    (4, NT) f32. Column n is node n's input x (nodes on lanes).
    # out_ref:   (2, NT) f32. Row 0 = y0, row 1 = y1 (lane-dense writeback).
    xt = xt_ref[...]                                   # (4, NT)
    coeff = coeff_ref[...]                             # (20, 2), one tiny load
    nt = xt.shape[1]

    y0 = jnp.zeros((1, nt), jnp.float32)
    y1 = jnp.zeros((1, nt), jnp.float32)

    # y_k[n] = sum_{i=0..4, j=0..3} A_k[i, j] * u_i[n] * x_j[n],  u = [x, 1].
    # Unrolled over the 5 "i" rows; each block is a (4, NT) VPU multiply plus
    # a 4-sublane reduce -- never touches the MXU.
    for i in range(D + 1):
        if i < D:
            blk = xt * xt[i:i + 1, :]                  # blk[j, n] = x_i * x_j
        else:
            blk = xt                                   # bias row: u_i = 1
        c0 = coeff[4 * i:4 * i + 4, 0:1]               # (4, 1) = A1[i, :]
        c1 = coeff[4 * i:4 * i + 4, 1:2]               # (4, 1) = A2[i, :]
        y0 = y0 + jnp.sum(c0 * blk, axis=0, keepdims=True)
        y1 = y1 + jnp.sum(c1 * blk, axis=0, keepdims=True)

    out_ref[0:1, :] = jnp.tanh(y0)                     # EUP tanh, full-lane store
    out_ref[1:2, :] = jnp.tanh(y1)


# ----------------------------------------------------------------------------
# Host-side helpers / wrappers.
# ----------------------------------------------------------------------------
def make_rntn_params(W1, b1, W2, b2):
    """Parameter-only packing: build once per (W1, b1, W2, b2), reuse for every
    forward call (hoisted out of the per-call path)."""
    W1 = jnp.asarray(W1, jnp.float32).reshape(D, D)
    W2 = jnp.asarray(W2, jnp.float32).reshape(D, D)
    b1 = jnp.asarray(b1, jnp.float32).reshape(D)
    b2 = jnp.asarray(b2, jnp.float32).reshape(D)
    A1 = jnp.concatenate([W1, b1[None, :]], axis=0)    # (5, 4)
    A2 = jnp.concatenate([W2, b2[None, :]], axis=0)    # (5, 4)
    return jnp.stack([A1.reshape(-1), A2.reshape(-1)], axis=1)  # (20, 2)


@functools.partial(jax.jit, static_argnames=("lane_tile",))
def rntn_forward_batched(coeff, X, *, lane_tile=512):
    """Evaluate N RNTN nodes in one pallas_call.

    coeff: (20, 2) from make_rntn_params.
    X:     (N, 4)  one input vector per node.
    Returns (N, 2) = tanh([x^T W1 x + b1.x, x^T W2 x + b2.x]) per node.
    """
    assert lane_tile % LANE == 0, "lane_tile must be a multiple of 128"
    N = X.shape[0]
    assert X.shape[1] == D
    n_tiles = (N + lane_tile - 1) // lane_tile
    n_pad = n_tiles * lane_tile

    # Nodes on lanes: (4, n_pad), zero-padded columns are harmless (y = 0).
    xt = jnp.zeros((D, n_pad), jnp.float32).at[:, :N].set(
        jnp.asarray(X, jnp.float32).T)

    # Per grid step: (4, lane_tile) in + (2, lane_tile) out + (20, 2) coeff,
    # a few KiB total -- comfortably inside the scoped VMEM budget on
    # v5e/v6e (32/128 MiB) and v7x (32/64 MiB) even with double buffering.
    out = pl.pallas_call(
        rntn_batched_kernel,
        out_shape=jax.ShapeDtypeStruct((VECTOR_LEN, n_pad), jnp.float32),
        grid=(n_tiles,),
        in_specs=[
            pl.BlockSpec((NTERMS, VECTOR_LEN), lambda i: (0, 0)),   # coeff
            pl.BlockSpec((D, lane_tile), lambda i: (0, i)),         # nodes
        ],
        out_specs=pl.BlockSpec((VECTOR_LEN, lane_tile), lambda i: (0, i)),
        compiler_params=pltpu.CompilerParams(
            dimension_semantics=("parallel",)),     # 2x on v7x (2 TC/chip)
    )(coeff, xt)

    return out[:, :N].T                              # (N, 2)


@jax.jit
def rntn_forward(x, W1, b1, W2, b2):
    """Module-faithful single-node forward: returns (1, 2) like RNTN.forward."""
    x = jnp.asarray(x, jnp.float32).reshape(-1)
    # Emulate torch's x.resize(vector_len * 2): take the first 4 elements.
    assert x.size >= D, "input must have at least vector_len*2 = 4 elements"
    x = x[:D]
    coeff = make_rntn_params(W1, b1, W2, b2)
    return rntn_forward_batched(coeff, x[None, :], lane_tile=LANE)  # (1, 2)


# ----------------------------------------------------------------------------
# Self-test.
# ----------------------------------------------------------------------------
def _reference(X, W1, b1, W2, b2):
    """Pure-JAX reference matching torch: mv(L_k(x_row), x), then tanh."""
    H1 = X @ W1.T + b1
    H2 = X @ W2.T + b2
    y0 = jnp.sum(H1 * X, axis=1)
    y1 = jnp.sum(H2 * X, axis=1)
    return jnp.tanh(jnp.stack([y0, y1], axis=1))     # (N, 2)


if __name__ == "__main__":
    key = jax.random.PRNGKey(0)
    k1, k2, k3, k4, k5, k6 = jax.random.split(key, 6)

    # PyTorch-Linear-style uniform(-1/sqrt(D), 1/sqrt(D)) parameters.
    bound = 1.0 / float(D) ** 0.5
    W1 = jax.random.uniform(k1, (D, D), jnp.float32, -bound, bound)
    b1 = jax.random.uniform(k2, (D,), jnp.float32, -bound, bound)
    W2 = jax.random.uniform(k3, (D, D), jnp.float32, -bound, bound)
    b2 = jax.random.uniform(k4, (D,), jnp.float32, -bound, bound)

    # --- single-node path (matches the module's forward exactly) -----------
    x = jax.random.normal(k5, (D,), jnp.float32)
    out1 = rntn_forward(x, W1, b1, W2, b2)
    jax.block_until_ready(out1)
    ref1 = _reference(x[None, :], W1, b1, W2, b2)
    assert out1.shape == (1, VECTOR_LEN)
    assert jnp.allclose(out1, ref1, atol=2e-5), (out1, ref1)

    # --- batched path: many tree nodes per pallas_call ---------------------
    N = 1024
    Xb = jax.random.normal(k6, (N, D), jnp.float32)
    coeff = make_rntn_params(W1, b1, W2, b2)          # hoisted, reused per call
    outb = rntn_forward_batched(coeff, Xb, lane_tile=512)
    jax.block_until_ready(outb)
    refb = _reference(Xb, W1, b1, W2, b2)
    assert outb.shape == (N, VECTOR_LEN)
    assert jnp.allclose(outb, refb, atol=2e-5), float(jnp.abs(outb - refb).max())

    print("KERNEL_OK")
</pallas_src>

<mosaic_0001>
module attributes {stable_mosaic.version = 11 : i64} {
  func.func @rntn_batched_kernel(%arg0: i32, %arg1: memref<20x2xf32, #tpu.memory_space<vmem>>, %arg2: memref<4x128xf32, #tpu.memory_space<vmem>>, %arg3: memref<2x128xf32, #tpu.memory_space<vmem>>) attributes {dimension_semantics = [#tpu.dimension_semantics<parallel>], iteration_bounds = array<i64: 1>, scalar_prefetch = 0 : i64, scratch_operands = 0 : i64, tpu.core_type = #tpu.core_type<tc>, window_params = [{pipeline_mode = #tpu.pipeline_mode<synchronous>, transform_indices = @transform_0, window_bounds = array<i64: 20, 2>}, {transform_indices = @transform_1, window_bounds = array<i64: 4, 128>}, {transform_indices = @transform_2, window_bounds = array<i64: 2, 128>}]} {
    %c0 = arith.constant 0 : index
    %c0_0 = arith.constant 0 : index
    %0 = vector.load %arg2[%c0, %c0_0] : memref<4x128xf32, #tpu.memory_space<vmem>>, vector<4x128xf32>
    %c0_1 = arith.constant 0 : index
    %c0_2 = arith.constant 0 : index
    %1 = vector.load %arg1[%c0_1, %c0_2] : memref<20x2xf32, #tpu.memory_space<vmem>>, vector<20x2xf32>
    %cst = arith.constant 0.000000e+00 : f32
    %2 = vector.broadcast %cst : f32 to vector<1x128xf32>
    %cst_3 = arith.constant 0.000000e+00 : f32
    %3 = vector.broadcast %cst_3 : f32 to vector<1x128xf32>
    %4 = vector.extract_strided_slice %0 {offsets = [0, 0], sizes = [1, 128], strides = [1, 1]} : vector<4x128xf32> to vector<1x128xf32>
    %5 = vector.broadcast %4 : vector<1x128xf32> to vector<4x128xf32>
    %6 = arith.mulf %0, %5 : vector<4x128xf32>
    %7 = vector.extract_strided_slice %1 {offsets = [0, 0], sizes = [4, 1], strides = [1, 1]} : vector<20x2xf32> to vector<4x1xf32>
    %8 = vector.extract_strided_slice %1 {offsets = [0, 1], sizes = [4, 1], strides = [1, 1]} : vector<20x2xf32> to vector<4x1xf32>
    %9 = vector.broadcast %7 : vector<4x1xf32> to vector<4x128xf32>
    %10 = arith.mulf %9, %6 : vector<4x128xf32>
    %cst_4 = arith.constant dense<0.000000e+00> : vector<128xf32>
    %11 = vector.multi_reduction <add>, %10, %cst_4 [0] : vector<4x128xf32> to vector<128xf32>
    %12 = vector.shape_cast %11 : vector<128xf32> to vector<1x128xf32>
    %13 = arith.addf %2, %12 : vector<1x128xf32>
    %14 = vector.broadcast %8 : vector<4x1xf32> to vector<4x128xf32>
    %15 = arith.mulf %14, %6 : vector<4x128xf32>
    %cst_5 = arith.constant dense<0.000000e+00> : vector<128xf32>
    %16 = vector.multi_reduction <add>, %15, %cst_5 [0] : vector<4x128xf32> to vector<128xf32>
    %17 = vector.shape_cast %16 : vector<128xf32> to vector<1x128xf32>
    %18 = arith.addf %3, %17 : vector<1x128xf32>
    %19 = vector.extract_strided_slice %0 {offsets = [1, 0], sizes = [1, 128], strides = [1, 1]} : vector<4x128xf32> to vector<1x128xf32>
    %20 = vector.broadcast %19 : vector<1x128xf32> to vector<4x128xf32>
    %21 = arith.mulf %0, %20 : vector<4x128xf32>
    %22 = vector.extract_strided_slice %1 {offsets = [4, 0], sizes = [4, 1], strides = [1, 1]} : vector<20x2xf32> to vector<4x1xf32>
    %23 = vector.extract_strided_slice %1 {offsets = [4, 1], sizes = [4, 1], strides = [1, 1]} : vector<20x2xf32> to vector<4x1xf32>
    %24 = vector.broadcast %22 : vector<4x1xf32> to vector<4x128xf32>
    %25 = arith.mulf %24, %21 : vector<4x128xf32>
    %cst_6 = arith.constant dense<0.000000e+00> : vector<128xf32>
    %26 = vector.multi_reduction <add>, %25, %cst_6 [0] : vector<4x128xf32> to vector<128xf32>
    %27 = vector.shape_cast %26 : vector<128xf32> to vector<1x128xf32>
    %28 = arith.addf %13, %27 : vector<1x128xf32>
    %29 = vector.broadcast %23 : vector<4x1xf32> to vector<4x128xf32>
    %30 = arith.mulf %29, %21 : vector<4x128xf32>
    %cst_7 = arith.constant dense<0.000000e+00> : vector<128xf32>
    %31 = vector.multi_reduction <add>, %30, %cst_7 [0] : vector<4x128xf32> to vector<128xf32>
    %32 = vector.shape_cast %31 : vector<128xf32> to vector<1x128xf32>
    %33 = arith.addf %18, %32 : vector<1x128xf32>
    %34 = vector.extract_strided_slice %0 {offsets = [2, 0], sizes = [1, 128], strides = [1, 1]} : vector<4x128xf32> to vector<1x128xf32>
    %35 = vector.broadcast %34 : vector<1x128xf32> to vector<4x128xf32>
    %36 = arith.mulf %0, %35 : vector<4x128xf32>
    %37 = vector.extract_strided_slice %1 {offsets = [8, 0], sizes = [4, 1], strides = [1, 1]} : vector<20x2xf32> to vector<4x1xf32>
    %38 = vector.extract_strided_slice %1 {offsets = [8, 1], sizes = [4, 1], strides = [1, 1]} : vector<20x2xf32> to vector<4x1xf32>
    %39 = vector.broadcast %37 : vector<4x1xf32> to vector<4x128xf32>
    %40 = arith.mulf %39, %36 : vector<4x128xf32>
    %cst_8 = arith.constant dense<0.000000e+00> : vector<128xf32>
    %41 = vector.multi_reduction <add>, %40, %cst_8 [0] : vector<4x128xf32> to vector<128xf32>
    %42 = vector.shape_cast %41 : vector<128xf32> to vector<1x128xf32>
    %43 = arith.addf %28, %42 : vector<1x128xf32>
    %44 = vector.broadcast %38 : vector<4x1xf32> to vector<4x128xf32>
    %45 = arith.mulf %44, %36 : vector<4x128xf32>
    %cst_9 = arith.constant dense<0.000000e+00> : vector<128xf32>
    %46 = vector.multi_reduction <add>, %45, %cst_9 [0] : vector<4x128xf32> to vector<128xf32>
    %47 = vector.shape_cast %46 : vector<128xf32> to vector<1x128xf32>
    %48 = arith.addf %33, %47 : vector<1x128xf32>
    %49 = vector.extract_strided_slice %0 {offsets = [3, 0], sizes = [1, 128], strides = [1, 1]} : vector<4x128xf32> to vector<1x128xf32>
    %50 = vector.broadcast %49 : vector<1x128xf32> to vector<4x128xf32>
    %51 = arith.mulf %0, %50 : vector<4x128xf32>
    %52 = vector.extract_strided_slice %1 {offsets = [12, 0], sizes = [4, 1], strides = [1, 1]} : vector<20x2xf32> to vector<4x1xf32>
    %53 = vector.extract_strided_slice %1 {offsets = [12, 1], sizes = [4, 1], strides = [1, 1]} : vector<20x2xf32> to vector<4x1xf32>
    %54 = vector.broadcast %52 : vector<4x1xf32> to vector<4x128xf32>
    %55 = arith.mulf %54, %51 : vector<4x128xf32>
    %cst_10 = arith.constant dense<0.000000e+00> : vector<128xf32>
    %56 = vector.multi_reduction <add>, %55, %cst_10 [0] : vector<4x128xf32> to vector<128xf32>
    %57 = vector.shape_cast %56 : vector<128xf32> to vector<1x128xf32>
    %58 = arith.addf %43, %57 : vector<1x128xf32>
    %59 = vector.broadcast %53 : vector<4x1xf32> to vector<4x128xf32>
    %60 = arith.mulf %59, %51 : vector<4x128xf32>
    %cst_11 = arith.constant dense<0.000000e+00> : vector<128xf32>
    %61 = vector.multi_reduction <add>, %60, %cst_11 [0] : vector<4x128xf32> to vector<128xf32>
    %62 = vector.shape_cast %61 : vector<128xf32> to vector<1x128xf32>
    %63 = arith.addf %48, %62 : vector<1x128xf32>
    %64 = vector.extract_strided_slice %1 {offsets = [16, 0], sizes = [4, 1], strides = [1, 1]} : vector<20x2xf32> to vector<4x1xf32>
    %65 = vector.extract_strided_slice %1 {offsets = [16, 1], sizes = [4, 1], strides = [1, 1]} : vector<20x2xf32> to vector<4x1xf32>
    %66 = vector.broadcast %64 : vector<4x1xf32> to vector<4x128xf32>
    %67 = arith.mulf %66, %0 : vector<4x128xf32>
    %cst_12 = arith.constant dense<0.000000e+00> : vector<128xf32>
    %68 = vector.multi_reduction <add>, %67, %cst_12 [0] : vector<4x128xf32> to vector<128xf32>
    %69 = vector.shape_cast %68 : vector<128xf32> to vector<1x128xf32>
    %70 = arith.addf %58, %69 : vector<1x128xf32>
    %71 = vector.broadcast %65 : vector<4x1xf32> to vector<4x128xf32>
    %72 = arith.mulf %71, %0 : vector<4x128xf32>
    %cst_13 = arith.constant dense<0.000000e+00> : vector<128xf32>
    %73 = vector.multi_reduction <add>, %72, %cst_13 [0] : vector<4x128xf32> to vector<128xf32>
    %74 = vector.shape_cast %73 : vector<128xf32> to vector<1x128xf32>
    %75 = arith.addf %63, %74 : vector<1x128xf32>
    %76 = math.tanh %70 : vector<1x128xf32>
    %c0_14 = arith.constant 0 : index
    %c0_15 = arith.constant 0 : index
    %77 = vector.load %arg3[%c0_14, %c0_15] : memref<2x128xf32, #tpu.memory_space<vmem>>, vector<1x128xf32>
    tpu.vector_store %arg3[%c0_14, %c0_15], %76 {strides = array<i32>} : memref<2x128xf32, #tpu.memory_space<vmem>>, vector<1x128xf32>,
    %78 = math.tanh %75 : vector<1x128xf32>
    %c1 = arith.constant 1 : index
    %c0_16 = arith.constant 0 : index
    %79 = vector.load %arg3[%c1, %c0_16] : memref<2x128xf32, #tpu.memory_space<vmem>>, vector<1x128xf32>
    tpu.vector_store %arg3[%c1, %c0_16], %78 {strides = array<i32>} : memref<2x128xf32, #tpu.memory_space<vmem>>, vector<1x128xf32>,
    return
  }
  func.func @transform_0(%arg0: i32) -> (i32, i32) {
    %c0_i32 = arith.constant 0 : i32
    %c0_i32_0 = arith.constant 0 : i32
    %c0_i32_1 = arith.constant 0 : i32
    return %c0_i32, %c0_i32_0 : i32, i32
  }
  func.func @transform_1(%arg0: i32) -> (i32, i32) {
    %c0_i32 = arith.constant 0 : i32
    %c0_i32_0 = arith.constant 0 : i32
    return %c0_i32, %arg0 : i32, i32
  }
  func.func @transform_2(%arg0: i32) -> (i32, i32) {
    %c0_i32 = arith.constant 0 : i32
    %c0_i32_0 = arith.constant 0 : i32
    return %c0_i32, %arg0 : i32, i32
  }
}

</mosaic_0001>

<llo_original>
// kernel: rntn_forward_batched.1
$region0: #{rntn_forward_batched.1}
  #allocation0 [shape = 'u32[]', space=smem, size = 0x4, offset = 0x4, fixed_abs, tag = 'smem constant byte address 0x4 - core index']
  #allocation1 [shape = 'u32[144,128]{1,0:T(1,128)}', space=vmem, size = 0x12000, scoped, tag = 'internal scratch']
  %s0 = inlined_call_operand.vmem [shape: f32[20,2], index: 0, kind: input, shape index: {}]
  %s1 = inlined_call_operand.vmem [shape: f32[4,128], index: 1, kind: input, shape index: {}]
  %s2 = inlined_call_operand.vmem [shape: f32[2,128], index: 2, kind: output, shape index: {}]
  %s3 = sld [smem:[#allocation0]]
  $region18: #{rntn_forward_batched.1} parent=0
    _
  %s5 = ssub.s32 1, %s3
  %s6 = scalar_select 0, %s5, %s3
  // Predicated region
  $region2: #{rntn_forward_batched.1} parent=0 // pred_check
    _
  $region3: #{rntn_forward_batched.1} parent=0 // pred_check_branch
    %8 = sbr.rel (0) target = $region5
  $region4: #{rntn_forward_batched.1} parent=0 // pred_region
    _
  $region5: #{rntn_forward_batched.1} parent=0 // pred_fallthru
    _
  // Predicated region
  $region6: #{rntn_forward_batched.1} parent=0 // pred_check
    _
  $region7: #{rntn_forward_batched.1} parent=0 // pred_check_branch
    %10 = sbr.rel (0) target = $region9
  $region8: #{rntn_forward_batched.1} parent=0 // pred_region
    _
  $region9: #{rntn_forward_batched.1} parent=0 // pred_fallthru
    _
  %v11 = vld [vmem:[%s1] sm:$0xf]
  %v12 = vld [vmem:[%s0] sm:$0xff]
  %v13 = vld [vmem:[%s0 + $0x8] sm:$0xff]
  %v14 = vld [vmem:[%s0 + $0x10] sm:$0xf]
  %v15 = vlaneseq
  %v16 = vshrl.u32 %v15, 7
  %v17 = vsub.s32 0, %v16
  %v18 = vrot.slane %v11, %v17
  %v19 = vmul.f32 %v11, %v18
  %21 = vset.pattern.permute.xlu0 0
  %22 = vperm.xlu0 %21, %v12
  %v23 = vpop.permute.xlu0 %22
  %v25 = vmul.f32 %v23, %v19
  %vm26 = vcmask 1043456
  %v27 = vsel %vm26, %v25, 0.0
  %v28 = vrot.slane %v27, 4
  %v29 = vadd.f32 %v27, %v28
  %v30 = vrot.slane %v29, 2
  %v31 = vadd.f32 %v29, %v30
  %v32 = vrot.slane %v31, 1
  %v33 = vadd.f32 %v31, %v32
  %v34 = vadd.f32 %v33, 0.0
  %35 = vset.pattern.permute.xlu0 1
  %36 = vperm.xlu0 %35, %v12
  %v37 = vpop.permute.xlu0 %36
  %v39 = vmul.f32 %v37, %v19
  %v40 = vsel %vm26, %v39, 0.0
  %v41 = vrot.slane %v40, 4
  %v42 = vadd.f32 %v40, %v41
  %v43 = vrot.slane %v42, 2
  %v44 = vadd.f32 %v42, %v43
  %v45 = vrot.slane %v44, 1
  %v46 = vadd.f32 %v44, %v45
  %v47 = vadd.f32 %v46, 0.0
  %v48 = vlaneseq
  %v49 = vshrl.u32 %v48, 7
  %v50 = vsub.s32 1, %v49
  %v51 = vrot.slane %v11, %v50
  %v52 = vmul.f32 %v11, %v51
  %v54 = vrot.slane %v52, 4
  %v56 = vmul.f32 %v23, %v54
  %v58 = vrot.slane %v56, 4
  %v60 = vsel %vm26, %v58, 0.0
  %v61 = vrot.slane %v60, 4
  %v62 = vadd.f32 %v60, %v61
  %v63 = vrot.slane %v62, 2
  %v64 = vadd.f32 %v62, %v63
  %v65 = vrot.slane %v64, 1
  %v66 = vadd.f32 %v64, %v65
  %v67 = vadd.f32 %v34, %v66
  %v68 = vmul.f32 %v37, %v54
  %v70 = vrot.slane %v68, 4
  %v72 = vsel %vm26, %v70, 0.0
  %v73 = vrot.slane %v72, 4
  %v74 = vadd.f32 %v72, %v73
  %v75 = vrot.slane %v74, 2
  %v76 = vadd.f32 %v74, %v75
  %v77 = vrot.slane %v76, 1
  %v78 = vadd.f32 %v76, %v77
  %v79 = vadd.f32 %v47, %v78
  %v80 = vlaneseq
  %v81 = vshrl.u32 %v80, 7
  %v82 = vsub.s32 2, %v81
  %v83 = vrot.slane %v11, %v82
  %v84 = vmul.f32 %v11, %v83
  %86 = vset.pattern.permute.xlu0 0
  %87 = vperm.xlu0 %86, %v13
  %v88 = vpop.permute.xlu0 %87
  %v90 = vmul.f32 %v88, %v84
  %v91 = vsel %vm26, %v90, 0.0
  %v92 = vrot.slane %v91, 4
  %v93 = vadd.f32 %v91, %v92
  %v94 = vrot.slane %v93, 2
  %v95 = vadd.f32 %v93, %v94
  %v96 = vrot.slane %v95, 1
  %v97 = vadd.f32 %v95, %v96
  %v98 = vadd.f32 %v67, %v97
  %99 = vset.pattern.permute.xlu0 1
  %100 = vperm.xlu0 %99, %v13
  %v101 = vpop.permute.xlu0 %100
  %v103 = vmul.f32 %v101, %v84
  %v104 = vsel %vm26, %v103, 0.0
  %v105 = vrot.slane %v104, 4
  %v106 = vadd.f32 %v104, %v105
  %v107 = vrot.slane %v106, 2
  %v108 = vadd.f32 %v106, %v107
  %v109 = vrot.slane %v108, 1
  %v110 = vadd.f32 %v108, %v109
  %v111 = vadd.f32 %v79, %v110
  %v112 = vlaneseq
  %v113 = vshrl.u32 %v112, 7
  %v114 = vsub.s32 3, %v113
  %v115 = vrot.slane %v11, %v114
  %v116 = vmul.f32 %v11, %v115
  %v118 = vrot.slane %v116, 4
  %v120 = vmul.f32 %v88, %v118
  %v122 = vrot.slane %v120, 4
  %v124 = vsel %vm26, %v122, 0.0
  %v125 = vrot.slane %v124, 4
  %v126 = vadd.f32 %v124, %v125
  %v127 = vrot.slane %v126, 2
  %v128 = vadd.f32 %v126, %v127
  %v129 = vrot.slane %v128, 1
  %v130 = vadd.f32 %v128, %v129
  %v131 = vadd.f32 %v98, %v130
  %v132 = vmul.f32 %v101, %v118
  %v134 = vrot.slane %v132, 4
  %v136 = vsel %vm26, %v134, 0.0
  %v137 = vrot.slane %v136, 4
  %v138 = vadd.f32 %v136, %v137
  %v139 = vrot.slane %v138, 2
  %v140 = vadd.f32 %v138, %v139
  %v141 = vrot.slane %v140, 1
  %v142 = vadd.f32 %v140, %v141
  %v143 = vadd.f32 %v111, %v142
  %145 = vset.pattern.permute.xlu0 0
  %146 = vperm.xlu0 %145, %v14
  %v147 = vpop.permute.xlu0 %146
  %v149 = vmul.f32 %v147, %v11
  %v150 = vsel %vm26, %v149, 0.0
  %v151 = vrot.slane %v150, 4
  %v152 = vadd.f32 %v150, %v151
  %v153 = vrot.slane %v152, 2
  %v154 = vadd.f32 %v152, %v153
  %v155 = vrot.slane %v154, 1
  %v156 = vadd.f32 %v154, %v155
  %v157 = vadd.f32 %v131, %v156
  %158 = vset.pattern.permute.xlu0 1
  %159 = vperm.xlu0 %158, %v14
  %v160 = vpop.permute.xlu0 %159
  %v162 = vmul.f32 %v160, %v11
  %v163 = vsel %vm26, %v162, 0.0
  %v164 = vrot.slane %v163, 4
  %v165 = vadd.f32 %v163, %v164
  %v166 = vrot.slane %v165, 2
  %v167 = vadd.f32 %v165, %v166
  %v168 = vrot.slane %v167, 1
  %v169 = vadd.f32 %v167, %v168
  %v170 = vadd.f32 %v143, %v169
  %v171 = vtanh.pop %v157
  %172 = vst [vmem:[%s2] sm:$0x1] %v171
  %v173 = vtanh.pop %v170
  %174 = vst [vmem:[%s2 + $0x1] sm:$0x1] %v173
  // Predicated region
  $region10: #{rntn_forward_batched.1} parent=0 // pred_check
    _
  $region11: #{rntn_forward_batched.1} parent=0 // pred_check_branch
    %176 = sbr.rel (0) target = $region13
  $region12: #{rntn_forward_batched.1} parent=0 // pred_region
    _
  $region13: #{rntn_forward_batched.1} parent=0 // pred_fallthru
    _
  // Predicated region
  $region14: #{rntn_forward_batched.1} parent=0 // pred_check
    _
  $region15: #{rntn_forward_batched.1} parent=0 // pred_check_branch
    %178 = sbr.rel (0) target = $region17
  $region16: #{rntn_forward_batched.1} parent=0 // pred_region
    _
  $region17: #{rntn_forward_batched.1} parent=0 // pred_fallthru
    _

</llo_original>
